<compile_context>
chip_gen: v6e
topology: v6e:2x2x1
jax: 0.10.0
libtpu: 0.0.40
codegen_flags: <defaults>
</compile_context>

<pallas_src>
import functools

import jax
import jax.numpy as jnp
from jax import lax
from jax.experimental import pallas as pl
from jax.experimental.pallas import tpu as pltpu

EPS = 1e-6


# ---------------------------------------------------------------------------
# Kernel
# ---------------------------------------------------------------------------
def hel_kernel(p_ref, t_ref, m_ref, ones_ref, out_ref, acc_ref, *,
               H, W, TBC, BC, steps, use_mxu):
    """One (TBC, H*W) batch of lane-flattened images per grid step."""
    c = pl.program_id(0)            # megacore-parallel axis
    i = pl.program_id(1)            # sequential accumulation axis
    HW = H * W

    @pl.when(i == 0)
    def _init():
        acc_ref[...] = jnp.zeros_like(acc_ref)

    p = p_ref[...].astype(jnp.float32)          # (TBC, HW)
    t = t_ref[...].astype(jnp.float32)          # (TBC, HW)

    # Separable, zero-padded 5x5 box sum of the target on the lane-flattened
    # image: lane rolls of +-1,+-2 (W direction) then +-W,+-2W (H direction),
    # each tap gated by a precomputed boundary mask (pure mul+add on the VPU).
    acc = t
    for k, d in enumerate((-2, -1, 1, 2)):
        shifted = pltpu.roll(t, shift=(-d) % HW, axis=1)        # shifted[i] = t[i + d]
        acc = acc + shifted * m_ref[k:k + 1, :]
    wsum = acc
    for k, d in enumerate((-2, -1, 1, 2)):
        shifted = pltpu.roll(acc, shift=(-d * W) % HW, axis=1)  # acc[i + d*W]
        wsum = wsum + shifted * m_ref[4 + k:5 + k, :]

    # edge = (target - avg_pool5x5(target)) != 0, written as the exact test
    # boxsum != 25*t (bit-robust for binary masks, avoids the 1/25 rounding).
    edge = (wsum != 25.0 * t).astype(jnp.float32)

    if use_mxu:
        ones = ones_ref[...]                                    # (HW, 128) f32

        def rsum(x):                # row sums on the (otherwise idle) MXU
            return jnp.dot(x, ones, preferred_element_type=jnp.float32)[:, :1]
    else:
        def rsum(x):                # VPU/XLU fallback
            return jnp.sum(x, axis=1, keepdims=True)

    s_t = rsum(t)                                               # (TBC, 1)
    s_p = rsum(p)
    s_tp = rsum(t * p)
    s_e = rsum(edge)
    s_ed = rsum(edge * jnp.abs(p - t))

    hw = float(HW)
    loss_rows = (s_ed / (s_e + EPS)                   # edge loss
                 + (s_t - s_tp) / (s_t + EPS)         # foreground region loss
                 + (s_p - s_tp) / (hw - s_t + EPS))   # background region loss

    # Zero rows beyond the true B*C (ragged tail / spare-core duplicate
    # block).  jnp.where also kills any NaN/Inf coming from the unspecified
    # contents of partially out-of-bounds input blocks.
    row0 = (c * steps + i) * TBC
    rows = row0 + lax.broadcasted_iota(jnp.int32, (TBC, 1), 0)
    acc_ref[...] += jnp.where(rows < BC, loss_rows, 0.0)

    @pl.when(i == pl.num_programs(1) - 1)
    def _finalize():
        # Single cross-sublane reduce, once per core.
        out_ref[0] = jnp.sum(acc_ref[...], axis=0, keepdims=True)


# ---------------------------------------------------------------------------
# Chip-aware sizing helpers
# ---------------------------------------------------------------------------
def _round_up(x, m):
    return -(-x // m) * m


def _vmem_capacity_bytes():
    try:
        v = getattr(pltpu.get_tpu_info(), "vmem_capacity_bytes", None)
        if v:
            return int(v)
    except Exception:
        pass
    return 64 * 1024 * 1024          # conservative default (v7x per-TC VMEM)


def _num_tensorcores():
    # Multi-TensorCore chips get a real "parallel" leading grid axis; on
    # single-TC v5e/v6e we keep P=1 so small batches do not pay for a dead
    # serial slice.  (v7x could also use CORE_PARALLEL semantics; "parallel"
    # is the portable choice.)
    try:
        kind = jax.devices()[0].device_kind.lower()
    except Exception:
        return 1
    return 2 if any(tag in kind for tag in ("v4", "v5p", "v7")) else 1


# ---------------------------------------------------------------------------
# Wrapper
# ---------------------------------------------------------------------------
def _hel_impl(pred, target, use_mxu):
    B, C, H, W = pred.shape
    BC = B * C
    HW = H * W
    itemsize = jnp.dtype(pred.dtype).itemsize

    P = max(1, min(_num_tensorcores(), BC))
    physical_vmem = _vmem_capacity_bytes()
    vmem_limit = int(min(physical_vmem * 3 // 4, 96 * 1024 * 1024))

    # MXU row-sums only pay off while the ones matrix is a small resident
    # constant; very large images use the VPU/XLU reduction instead.
    use_mxu = bool(use_mxu) and (HW * 128 * 4 * 2 <= vmem_limit // 3)

    sub = max(8, 32 // itemsize)                 # dtype-native sublane multiple
    fixed = 2 * 8 * HW * 4                       # (8, HW) boundary masks (x2 bufs)
    if use_mxu:
        fixed += 2 * HW * 128 * 4                # (HW, 128) ones matrix (x2 bufs)
    fixed += 2 * 1024 * 1024                     # outputs, semaphores, slack
    unit = HW * (4 * itemsize + 32)              # 2 dbl-buffered inputs + ~8 live f32 temps
    budget = max(vmem_limit - fixed, unit * sub)
    tbc_cap = max(sub, (budget // unit) // sub * sub)

    TBC = int(min(tbc_cap, _round_up(-(-BC // P), sub)))
    steps = -(-BC // (P * TBC))
    last_blk = -(-BC // TBC) - 1                 # last real row-block of the input

    # Free reshape (row-major merge) -- no padding, no extra HBM traffic.
    p2 = pred.reshape(BC, HW)
    t2 = target.reshape(BC, HW)

    # Precomputed boundary-validity masks: 4 taps along W (lane shifts
    # -2,-1,+1,+2), then 4 taps along H (lane shifts -2W,-W,+W,+2W).
    col = jnp.tile(jnp.arange(W, dtype=jnp.int32), H)
    row = jnp.repeat(jnp.arange(H, dtype=jnp.int32), W)
    taps = []
    for d in (-2, -1, 1, 2):
        taps.append(col >= -d if d < 0 else col < W - d)
    for d in (-2, -1, 1, 2):
        taps.append(row >= -d if d < 0 else row < H - d)
    bmask = jnp.stack(taps, axis=0).astype(jnp.float32)           # (8, HW)

    ones_shape = (HW, 128) if use_mxu else (8, 128)               # dummy if unused
    ones = jnp.ones(ones_shape, jnp.float32)

    def tile_map(c, i):
        # Clamp so spare-core / overhang grid slots re-read the last real
        # block (their rows are zeroed in-kernel) instead of going OOB.
        return (jnp.minimum(c * steps + i, last_blk), 0)

    kernel = functools.partial(hel_kernel, H=H, W=W, TBC=TBC, BC=BC,
                               steps=steps, use_mxu=use_mxu)
    partial_sums = pl.pallas_call(
        kernel,
        out_shape=jax.ShapeDtypeStruct((P, 1, 1), jnp.float32),
        grid_spec=pltpu.PrefetchScalarGridSpec(
            num_scalar_prefetch=0,
            grid=(P, steps),
            in_specs=[
                pl.BlockSpec((TBC, HW), tile_map),
                pl.BlockSpec((TBC, HW), tile_map),
                pl.BlockSpec((8, HW), lambda c, i: (0, 0)),
                pl.BlockSpec(ones_shape, lambda c, i: (0, 0)),
            ],
            out_specs=pl.BlockSpec((1, 1, 1), lambda c, i: (c, 0, 0)),
            scratch_shapes=[pltpu.VMEM((TBC, 1), jnp.float32)],
        ),
        compiler_params=pltpu.CompilerParams(
            dimension_semantics=("parallel", "arbitrary"),
            vmem_limit_bytes=vmem_limit,
        ),
    )(p2, t2, bmask, ones)

    return jnp.sum(partial_sums) / BC


_hel_jit = jax.jit(_hel_impl, static_argnames="use_mxu")

# Resolved on the first call: does the MXU row-sum path compile on this
# jax/libtpu and match the VPU/XLU reduction to f32 accuracy?
_MXU_REDUCE_OK = None


def hel_loss(pred, target):
    """Mean HEL loss over (B, C); forward-equivalent to the PyTorch module."""
    global _MXU_REDUCE_OK
    if _MXU_REDUCE_OK is None:
        safe = jax.block_until_ready(_hel_jit(pred, target, use_mxu=False))
        try:
            fast = jax.block_until_ready(_hel_jit(pred, target, use_mxu=True))
            ok = bool(jnp.isfinite(fast)) and bool(
                jnp.abs(fast - safe) <= 1e-5 * jnp.abs(safe) + 1e-7)
            _MXU_REDUCE_OK = ok
        except Exception:
            _MXU_REDUCE_OK = False
        return safe
    return _hel_jit(pred, target, use_mxu=_MXU_REDUCE_OK)


# ---------------------------------------------------------------------------
# Pure-JAX reference (matches the PyTorch HEL forward)
# ---------------------------------------------------------------------------
def hel_reference(pred, target):
    eps = 1e-6
    pooled = lax.reduce_window(
        target, 0.0, lax.add,
        window_dimensions=(1, 1, 5, 5),
        window_strides=(1, 1, 1, 1),
        padding=((0, 0), (0, 0), (2, 2), (2, 2)),
    ) / 25.0
    edge = jnp.where(target - pooled != 0.0, 1.0, 0.0)
    e = (edge * jnp.abs(pred - target)).sum((2, 3)) / (edge.sum((2, 3)) + eps)
    f = (target - target * pred).sum((2, 3)) / (target.sum((2, 3)) + eps)
    b = ((1.0 - target) * pred).sum((2, 3)) / ((1.0 - target).sum((2, 3)) + eps)
    return (e + f + b).mean()


if __name__ == "__main__":
    key = jax.random.PRNGKey(0)
    k1, k2 = jax.random.split(key)
    B, C, H, W = 2, 4, 16, 16

    # pred: probabilities in (0, 1); target: binary mask (typical saliency GT).
    pred = jax.nn.sigmoid(jax.random.normal(k1, (B, C, H, W), jnp.float32))
    target = (jax.random.uniform(k2, (B, C, H, W)) > 0.5).astype(jnp.float32)

    loss = jax.block_until_ready(hel_loss(pred, target))
    ref = hel_reference(pred, target)
    assert jnp.allclose(loss, ref, rtol=1e-5, atol=1e-6), (loss, ref)
    print("KERNEL_OK")
</pallas_src>

<mosaic_0001>
module attributes {stable_mosaic.version = 11 : i64} {
  func.func @hel_kernel(%arg0: i32, %arg1: i32, %arg2: memref<8x256xf32, #tpu.memory_space<vmem>>, %arg3: memref<8x256xf32, #tpu.memory_space<vmem>>, %arg4: memref<8x256xf32, #tpu.memory_space<vmem>>, %arg5: memref<8x128xf32, #tpu.memory_space<vmem>>, %arg6: memref<1x1x1xf32, #tpu.memory_space<vmem>>, %arg7: memref<8x1xf32, #tpu.memory_space<vmem>>) attributes {dimension_semantics = [#tpu.dimension_semantics<parallel>, #tpu.dimension_semantics<arbitrary>], iteration_bounds = array<i64: 1, 1>, scalar_prefetch = 0 : i64, scratch_operands = 1 : i64, tpu.core_type = #tpu.core_type<tc>, window_params = [{transform_indices = @transform_0, window_bounds = array<i64: 8, 256>}, {transform_indices = @transform_1, window_bounds = array<i64: 8, 256>}, {pipeline_mode = #tpu.pipeline_mode<synchronous>, transform_indices = @transform_2, window_bounds = array<i64: 8, 256>}, {pipeline_mode = #tpu.pipeline_mode<synchronous>, transform_indices = @transform_3, window_bounds = array<i64: 8, 128>}, {transform_indices = @transform_4, window_bounds = array<i64: 1, 1, 1>}]} {
    %c0_i32 = arith.constant 0 : i32
    %0 = arith.cmpi eq, %arg1, %c0_i32 : i32
    %1 = arith.extui %0 : i1 to i32
    %c0_i32_0 = arith.constant 0 : i32
    %2 = arith.cmpi ne, %1, %c0_i32_0 : i32
    scf.if %2 {
      %cst_31 = arith.constant 0.000000e+00 : f32
      %95 = vector.broadcast %cst_31 : f32 to vector<8x1xf32>
      %c0_32 = arith.constant 0 : index
      %c0_33 = arith.constant 0 : index
      %96 = vector.load %arg7[%c0_32, %c0_33] : memref<8x1xf32, #tpu.memory_space<vmem>>, vector<8x1xf32>
      tpu.vector_store %arg7[%c0_32, %c0_33], %95 {strides = array<i32>} : memref<8x1xf32, #tpu.memory_space<vmem>>, vector<8x1xf32>,
    } else {
    }
    %c0 = arith.constant 0 : index
    %c0_1 = arith.constant 0 : index
    %3 = vector.load %arg2[%c0, %c0_1] : memref<8x256xf32, #tpu.memory_space<vmem>>, vector<8x256xf32>
    %c0_2 = arith.constant 0 : index
    %c0_3 = arith.constant 0 : index
    %4 = vector.load %arg3[%c0_2, %c0_3] : memref<8x256xf32, #tpu.memory_space<vmem>>, vector<8x256xf32>
    %c2_i32 = arith.constant 2 : i32
    %5 = tpu.dynamic_rotate %4 by %c2_i32 dim 1 : vector<8x256xf32>, i32 -> vector<8x256xf32>
    %c0_4 = arith.constant 0 : index
    %c0_5 = arith.constant 0 : index
    %6 = vector.load %arg4[%c0_4, %c0_5] : memref<8x256xf32, #tpu.memory_space<vmem>>, vector<1x256xf32>
    %7 = vector.broadcast %6 : vector<1x256xf32> to vector<8x256xf32>
    %8 = arith.mulf %5, %7 : vector<8x256xf32>
    %9 = arith.addf %4, %8 : vector<8x256xf32>
    %c1_i32 = arith.constant 1 : i32
    %10 = tpu.dynamic_rotate %4 by %c1_i32 dim 1 : vector<8x256xf32>, i32 -> vector<8x256xf32>
    %c1 = arith.constant 1 : index
    %c0_6 = arith.constant 0 : index
    %11 = vector.load %arg4[%c1, %c0_6] : memref<8x256xf32, #tpu.memory_space<vmem>>, vector<1x256xf32>
    %12 = vector.broadcast %11 : vector<1x256xf32> to vector<8x256xf32>
    %13 = arith.mulf %10, %12 : vector<8x256xf32>
    %14 = arith.addf %9, %13 : vector<8x256xf32>
    %c255_i32 = arith.constant 255 : i32
    %15 = tpu.dynamic_rotate %4 by %c255_i32 dim 1 : vector<8x256xf32>, i32 -> vector<8x256xf32>
    %c2 = arith.constant 2 : index
    %c0_7 = arith.constant 0 : index
    %16 = vector.load %arg4[%c2, %c0_7] : memref<8x256xf32, #tpu.memory_space<vmem>>, vector<1x256xf32>
    %17 = vector.broadcast %16 : vector<1x256xf32> to vector<8x256xf32>
    %18 = arith.mulf %15, %17 : vector<8x256xf32>
    %19 = arith.addf %14, %18 : vector<8x256xf32>
    %c254_i32 = arith.constant 254 : i32
    %20 = tpu.dynamic_rotate %4 by %c254_i32 dim 1 : vector<8x256xf32>, i32 -> vector<8x256xf32>
    %c3 = arith.constant 3 : index
    %c0_8 = arith.constant 0 : index
    %21 = vector.load %arg4[%c3, %c0_8] : memref<8x256xf32, #tpu.memory_space<vmem>>, vector<1x256xf32>
    %22 = vector.broadcast %21 : vector<1x256xf32> to vector<8x256xf32>
    %23 = arith.mulf %20, %22 : vector<8x256xf32>
    %24 = arith.addf %19, %23 : vector<8x256xf32>
    %c32_i32 = arith.constant 32 : i32
    %25 = tpu.dynamic_rotate %24 by %c32_i32 dim 1 : vector<8x256xf32>, i32 -> vector<8x256xf32>
    %c4 = arith.constant 4 : index
    %c0_9 = arith.constant 0 : index
    %26 = vector.load %arg4[%c4, %c0_9] : memref<8x256xf32, #tpu.memory_space<vmem>>, vector<1x256xf32>
    %27 = vector.broadcast %26 : vector<1x256xf32> to vector<8x256xf32>
    %28 = arith.mulf %25, %27 : vector<8x256xf32>
    %29 = arith.addf %24, %28 : vector<8x256xf32>
    %c16_i32 = arith.constant 16 : i32
    %30 = tpu.dynamic_rotate %24 by %c16_i32 dim 1 : vector<8x256xf32>, i32 -> vector<8x256xf32>
    %c5 = arith.constant 5 : index
    %c0_10 = arith.constant 0 : index
    %31 = vector.load %arg4[%c5, %c0_10] : memref<8x256xf32, #tpu.memory_space<vmem>>, vector<1x256xf32>
    %32 = vector.broadcast %31 : vector<1x256xf32> to vector<8x256xf32>
    %33 = arith.mulf %30, %32 : vector<8x256xf32>
    %34 = arith.addf %29, %33 : vector<8x256xf32>
    %c240_i32 = arith.constant 240 : i32
    %35 = tpu.dynamic_rotate %24 by %c240_i32 dim 1 : vector<8x256xf32>, i32 -> vector<8x256xf32>
    %c6 = arith.constant 6 : index
    %c0_11 = arith.constant 0 : index
    %36 = vector.load %arg4[%c6, %c0_11] : memref<8x256xf32, #tpu.memory_space<vmem>>, vector<1x256xf32>
    %37 = vector.broadcast %36 : vector<1x256xf32> to vector<8x256xf32>
    %38 = arith.mulf %35, %37 : vector<8x256xf32>
    %39 = arith.addf %34, %38 : vector<8x256xf32>
    %c224_i32 = arith.constant 224 : i32
    %40 = tpu.dynamic_rotate %24 by %c224_i32 dim 1 : vector<8x256xf32>, i32 -> vector<8x256xf32>
    %c7 = arith.constant 7 : index
    %c0_12 = arith.constant 0 : index
    %41 = vector.load %arg4[%c7, %c0_12] : memref<8x256xf32, #tpu.memory_space<vmem>>, vector<1x256xf32>
    %42 = vector.broadcast %41 : vector<1x256xf32> to vector<8x256xf32>
    %43 = arith.mulf %40, %42 : vector<8x256xf32>
    %44 = arith.addf %39, %43 : vector<8x256xf32>
    %cst = arith.constant 2.500000e+01 : f32
    %45 = vector.broadcast %cst : f32 to vector<8x256xf32>
    %46 = arith.mulf %45, %4 : vector<8x256xf32>
    %47 = arith.cmpf one, %44, %46 : vector<8x256xf32>
    %48 = arith.extui %47 : vector<8x256xi1> to vector<8x256xi32>
    %49 = arith.sitofp %48 : vector<8x256xi32> to vector<8x256xf32>
    %cst_13 = arith.constant dense<0.000000e+00> : vector<8xf32>
    %50 = vector.multi_reduction <add>, %4, %cst_13 [1] : vector<8x256xf32> to vector<8xf32>
    %51 = vector.shape_cast %50 : vector<8xf32> to vector<8x1xf32>
    %cst_14 = arith.constant dense<0.000000e+00> : vector<8xf32>
    %52 = vector.multi_reduction <add>, %3, %cst_14 [1] : vector<8x256xf32> to vector<8xf32>
    %53 = vector.shape_cast %52 : vector<8xf32> to vector<8x1xf32>
    %54 = arith.mulf %4, %3 : vector<8x256xf32>
    %cst_15 = arith.constant dense<0.000000e+00> : vector<8xf32>
    %55 = vector.multi_reduction <add>, %54, %cst_15 [1] : vector<8x256xf32> to vector<8xf32>
    %56 = vector.shape_cast %55 : vector<8xf32> to vector<8x1xf32>
    %cst_16 = arith.constant dense<0.000000e+00> : vector<8xf32>
    %57 = vector.multi_reduction <add>, %49, %cst_16 [1] : vector<8x256xf32> to vector<8xf32>
    %58 = vector.shape_cast %57 : vector<8xf32> to vector<8x1xf32>
    %59 = arith.subf %3, %4 : vector<8x256xf32>
    %60 = math.absf %59 : vector<8x256xf32>
    %61 = arith.mulf %49, %60 : vector<8x256xf32>
    %cst_17 = arith.constant dense<0.000000e+00> : vector<8xf32>
    %62 = vector.multi_reduction <add>, %61, %cst_17 [1] : vector<8x256xf32> to vector<8xf32>
    %63 = vector.shape_cast %62 : vector<8xf32> to vector<8x1xf32>
    %cst_18 = arith.constant 9.99999997E-7 : f32
    %64 = vector.broadcast %cst_18 : f32 to vector<8x1xf32>
    %65 = arith.addf %58, %64 : vector<8x1xf32>
    %66 = arith.divf %63, %65 : vector<8x1xf32>
    %67 = arith.subf %51, %56 : vector<8x1xf32>
    %cst_19 = arith.constant 9.99999997E-7 : f32
    %68 = vector.broadcast %cst_19 : f32 to vector<8x1xf32>
    %69 = arith.addf %51, %68 : vector<8x1xf32>
    %70 = arith.divf %67, %69 : vector<8x1xf32>
    %71 = arith.addf %66, %70 : vector<8x1xf32>
    %72 = arith.subf %53, %56 : vector<8x1xf32>
    %cst_20 = arith.constant 2.560000e+02 : f32
    %73 = vector.broadcast %cst_20 : f32 to vector<8x1xf32>
    %74 = arith.subf %73, %51 : vector<8x1xf32>
    %cst_21 = arith.constant 9.99999997E-7 : f32
    %75 = vector.broadcast %cst_21 : f32 to vector<8x1xf32>
    %76 = arith.addf %74, %75 : vector<8x1xf32>
    %77 = arith.divf %72, %76 : vector<8x1xf32>
    %78 = arith.addf %71, %77 : vector<8x1xf32>
    %c1_i32_22 = arith.constant 1 : i32
    %79 = arith.muli %arg0, %c1_i32_22 : i32
    %80 = arith.addi %79, %arg1 : i32
    %c8_i32 = arith.constant 8 : i32
    %81 = arith.muli %80, %c8_i32 : i32
    %82 = tpu.iota {dimensions = array<i32: 0>} : vector<8x1xi32>
    %83 = vector.broadcast %81 : i32 to vector<8x1xi32>
    %84 = arith.addi %83, %82 : vector<8x1xi32>
    %c0_23 = arith.constant 0 : index
    %c0_24 = arith.constant 0 : index
    %85 = vector.load %arg7[%c0_23, %c0_24] : memref<8x1xf32, #tpu.memory_space<vmem>>, vector<8x1xf32>
    %c8_i32_25 = arith.constant 8 : i32
    %86 = vector.broadcast %c8_i32_25 : i32 to vector<8x1xi32>
    %87 = arith.cmpi slt, %84, %86 : vector<8x1xi32>
    %cst_26 = arith.constant 0.000000e+00 : f32
    %88 = vector.broadcast %cst_26 : f32 to vector<8x1xf32>
    %89 = arith.select %87, %78, %88 : vector<8x1xi1>, vector<8x1xf32>
    %90 = arith.addf %85, %89 : vector<8x1xf32>
    %c0_27 = arith.constant 0 : index
    %c0_28 = arith.constant 0 : index
    %91 = vector.load %arg7[%c0_27, %c0_28] : memref<8x1xf32, #tpu.memory_space<vmem>>, vector<8x1xf32>
    tpu.vector_store %arg7[%c0_27, %c0_28], %90 {strides = array<i32>} : memref<8x1xf32, #tpu.memory_space<vmem>>, vector<8x1xf32>,
    %c0_i32_29 = arith.constant 0 : i32
    %92 = arith.cmpi eq, %arg1, %c0_i32_29 : i32
    %93 = arith.extui %92 : i1 to i32
    %c0_i32_30 = arith.constant 0 : i32
    %94 = arith.cmpi ne, %93, %c0_i32_30 : i32
    scf.if %94 {
      %c0_31 = arith.constant 0 : index
      %c0_32 = arith.constant 0 : index
      %95 = vector.load %arg7[%c0_31, %c0_32] : memref<8x1xf32, #tpu.memory_space<vmem>>, vector<8x1xf32>
      %cst_33 = arith.constant dense<0.000000e+00> : vector<1xf32>
      %96 = vector.multi_reduction <add>, %95, %cst_33 [0] : vector<8x1xf32> to vector<1xf32>
      %97 = vector.shape_cast %96 : vector<1xf32> to vector<1x1xf32>
      %c0_34 = arith.constant 0 : index
      %c0_35 = arith.constant 0 : index
      %c0_36 = arith.constant 0 : index
      %98 = vector.load %arg6[%c0_34, %c0_35, %c0_36] : memref<1x1x1xf32, #tpu.memory_space<vmem>>, vector<1x1x1xf32>
      %99 = vector.shape_cast %98 : vector<1x1x1xf32> to vector<1x1xf32>
      %100 = vector.shape_cast %97 : vector<1x1xf32> to vector<1x1x1xf32>
      tpu.vector_store %arg6[%c0_34, %c0_35, %c0_36], %100 {strides = array<i32>} : memref<1x1x1xf32, #tpu.memory_space<vmem>>, vector<1x1x1xf32>,
    } else {
    }
    return
  }
  func.func @transform_0(%arg0: i32, %arg1: i32) -> (i32, i32) {
    %c1_i32 = arith.constant 1 : i32
    %0 = arith.muli %arg0, %c1_i32 : i32
    %1 = arith.addi %0, %arg1 : i32
    %c0_i32 = arith.constant 0 : i32
    %2 = arith.minsi %1, %c0_i32 : i32
    %c0_i32_0 = arith.constant 0 : i32
    %c0_i32_1 = arith.constant 0 : i32
    return %2, %c0_i32_0 : i32, i32
  }
  func.func @transform_1(%arg0: i32, %arg1: i32) -> (i32, i32) {
    %c1_i32 = arith.constant 1 : i32
    %0 = arith.muli %arg0, %c1_i32 : i32
    %1 = arith.addi %0, %arg1 : i32
    %c0_i32 = arith.constant 0 : i32
    %2 = arith.minsi %1, %c0_i32 : i32
    %c0_i32_0 = arith.constant 0 : i32
    %c0_i32_1 = arith.constant 0 : i32
    return %2, %c0_i32_0 : i32, i32
  }
  func.func @transform_2(%arg0: i32, %arg1: i32) -> (i32, i32) {
    %c0_i32 = arith.constant 0 : i32
    %c0_i32_0 = arith.constant 0 : i32
    %c0_i32_1 = arith.constant 0 : i32
    return %c0_i32, %c0_i32_0 : i32, i32
  }
  func.func @transform_3(%arg0: i32, %arg1: i32) -> (i32, i32) {
    %c0_i32 = arith.constant 0 : i32
    %c0_i32_0 = arith.constant 0 : i32
    %c0_i32_1 = arith.constant 0 : i32
    return %c0_i32, %c0_i32_0 : i32, i32
  }
  func.func @transform_4(%arg0: i32, %arg1: i32) -> (i32, i32, i32) {
    %c0_i32 = arith.constant 0 : i32
    %c0_i32_0 = arith.constant 0 : i32
    %c0_i32_1 = arith.constant 0 : i32
    return %arg0, %c0_i32, %c0_i32_0 : i32, i32, i32
  }
}

</mosaic_0001>

<llo_original>
// kernel: _hel_impl.1
$region0: #{_hel_impl.1}
  #allocation0 [shape = 'u32[]', space=smem, size = 0x4, offset = 0x4, fixed_abs, tag = 'smem constant byte address 0x4 - core index']
  #allocation1 [shape = 'u32[144,128]{1,0:T(1,128)}', space=vmem, size = 0x12000, scoped, tag = 'internal scratch']
  #allocation2 [shape = 'f32[8,1]{1,0:T(8,128)}', space=vmem, size = 0x1000, scoped, tag = 'scratch operand']
  %s0 = inlined_call_operand.vmem [shape: f32[8,256], index: 0, kind: input, shape index: {}]
  %s1 = inlined_call_operand.vmem [shape: f32[8,256], index: 1, kind: input, shape index: {}]
  %s2 = inlined_call_operand.vmem [shape: f32[8,256], index: 2, kind: input, shape index: {}]
  %s3 = inlined_call_operand.vmem [shape: f32[8,128], index: 3, kind: input, shape index: {}]
  %s4 = inlined_call_operand.hbm [shape: f32[1,1,1], index: 4, kind: output, shape index: {}]
  %s5 = sld [smem:[#allocation0]]
  $region34: #{_hel_impl.1} parent=0
    _
  %s7 = ssub.s32 1, %s5
  %s8 = scalar_select 0, %s7, %s5
  $region1: #{_hel_impl.1} parent=0
    #allocation3 [shape = 'u8[512]{0}', space=vmem, size = 0x400, scoped, tag = 'output window, operand 0, single buffered']
    #allocation4 [shape = 's32[1]{0}', space=sflag, size = 0x4, scoped, tag = 'scoped memory for _hel_impl.1']
    %9 = vsyncpa [#allocation4], 0
    // Predicated region
    $region2: #{_hel_impl.1} parent=1 // pred_check
      _
    $region3: #{_hel_impl.1} parent=1 // pred_check_branch
      %11 = sbr.rel (0) target = $region5
    $region4: #{_hel_impl.1} parent=1 // pred_region
      %s12 = sadd.s32 0, 0
      %p13 = scmp.lt.s32.totalorder %s12, 0
      %s14 = scalar_select %p13, %s12, 0
      %p15 = scmp.lt.s32.totalorder %s14, 0
      %s16 = scalar_select %p15, %s14, 0
      %s17 = smul.addr %s16, 2
      %s18 = smul.addr %s17, 8
      %s19 = scalar_lea.vmem %s0, %s18
      %s20 = sadd.s32 0, 0
      %p21 = scmp.lt.s32.totalorder %s20, 0
      %s22 = scalar_select %p21, %s20, 0
    $region5: #{_hel_impl.1} parent=1 // pred_fallthru
      _
    // Predicated region
    $region6: #{_hel_impl.1} parent=1 // pred_check
      _
    $region7: #{_hel_impl.1} parent=1 // pred_check_branch
      %24 = sbr.rel (0) target = $region9
    $region8: #{_hel_impl.1} parent=1 // pred_region
      %s25 = sadd.s32 0, 0
      %p26 = scmp.lt.s32.totalorder %s25, 0
      %s27 = scalar_select %p26, %s25, 0
      %p28 = scmp.lt.s32.totalorder %s27, 0
      %s29 = scalar_select %p28, %s27, 0
      %s30 = smul.addr %s29, 2
      %s31 = smul.addr %s30, 8
      %s32 = scalar_lea.vmem %s1, %s31
      %s33 = sadd.s32 0, 0
      %p34 = scmp.lt.s32.totalorder %s33, 0
      %s35 = scalar_select %p34, %s33, 0
    $region9: #{_hel_impl.1} parent=1 // pred_fallthru
      _
    // Predicated region
    $region10: #{_hel_impl.1} parent=1 // pred_check
      _
    $region11: #{_hel_impl.1} parent=1 // pred_check_branch
      %37 = sbr.rel (0) target = $region13
    $region12: #{_hel_impl.1} parent=1 // pred_region
      _
    $region13: #{_hel_impl.1} parent=1 // pred_fallthru
      _
    // Predicated region
    $region14: #{_hel_impl.1} parent=1 // pred_check
      _
    $region15: #{_hel_impl.1} parent=1 // pred_check_branch
      %39 = sbr.rel (0) target = $region17
    $region16: #{_hel_impl.1} parent=1 // pred_region
      _
    $region17: #{_hel_impl.1} parent=1 // pred_fallthru
      _
    %s40 = sadd.s32 0, 0
    %p41 = scmp.lt.s32.totalorder %s40, 0
    %s42 = scalar_select %p41, %s40, 0
    %p43 = scmp.lt.s32.totalorder %s42, 0
    %s44 = scalar_select %p43, %s42, 0
    %s45 = smul.addr %s44, 2
    %s46 = smul.addr %s45, 8
    %s47 = scalar_lea.vmem %s0, %s46
    %s48 = sadd.s32 0, 0
    %p49 = scmp.lt.s32.totalorder %s48, 0
    %s50 = scalar_select %p49, %s48, 0
    %p51 = scmp.lt.s32.totalorder %s50, 0
    %s52 = scalar_select %p51, %s50, 0
    %s53 = smul.addr %s52, 2
    %s54 = smul.addr %s53, 8
    %s55 = scalar_lea.vmem %s1, %s54
    %s56 = sadd.s32 0, 0
    %p57 = scmp.lt.s32.totalorder %s56, 0
    %s58 = scalar_select %p57, %s56, 0
    %p59 = scmp.lt.s32.totalorder %s58, 0
    %s60 = scalar_select %p59, %s58, 0
    %s61 = smul.addr %s60, 2
    %s62 = smul.addr %s61, 8
    %s63 = scalar_lea.vmem %s0, %s62
    %s64 = sadd.s32 0, 0
    %p65 = scmp.lt.s32.totalorder %s64, 0
    %s66 = scalar_select %p65, %s64, 0
    %s67 = sadd.s32 0, 0
    %p68 = scmp.lt.s32.totalorder %s67, 0
    %s69 = scalar_select %p68, %s67, 0
    %p70 = scmp.lt.s32.totalorder %s69, 0
    %s71 = scalar_select %p70, %s69, 0
    %s72 = smul.addr %s71, 2
    %s73 = smul.addr %s72, 8
    %s74 = scalar_lea.vmem %s1, %s73
    %s75 = sadd.s32 0, 0
    %p76 = scmp.lt.s32.totalorder %s75, 0
    %s77 = scalar_select %p76, %s75, 0
    %p78 = scmp.eq.s32.totalorder 0, 0
    // Predicated region
    $region18: #{_hel_impl.1} parent=1 // pred_check
      %p79 = pneg %p78
    $region19: #{_hel_impl.1} parent=1 // pred_check_branch
      %81 = sbr.rel (%p79) target = $region21
    $region20: #{_hel_impl.1} parent=1 // pred_region
      %vm82 = vcmask 7168
      %83 = vst.msk [vmem:[#allocation2] sm:$0xff] %vm82, 0.0
    $region21: #{_hel_impl.1} parent=1 // pred_fallthru
      _
    %v84 = vld [vmem:[%s63] sm:$0xff]
    %v85 = vld [vmem:[%s63 + $0x8] sm:$0xff]
    %v86 = vld [vmem:[%s74] sm:$0xff]
    %v87 = vld [vmem:[%s74 + $0x8] sm:$0xff]
    %88 = vrot.lane.b32.xlu0 %v86, 2
    %v89 = vpop.permute.xlu0 %88
    %90 = vrot.lane.b32.xlu0 %v87, 2
    %v91 = vpop.permute.xlu0 %90
    %v92 = vlaneseq
    %v93 = vand.u32 %v92, 127
    %vm94 = vcmp.lt.s32.totalorder %v93, 2
    %v95 = vsel %vm94, %v89, %v91
    %v96 = vsel %vm94, %v91, %v89
    %v97 = vld [vmem:[%s2] ss:$8 sm:$0x3]
    %v99 = vlaneseq
    %v100 = vshrl.u32 %v99, 7
    %v101 = vsub.s32 0, %v100
    %v102 = vrot.slane %v97, %v101
    %v103 = vlaneseq
    %v104 = vshrl.u32 %v103, 7
    %v105 = vsub.s32 1, %v104
    %v106 = vrot.slane %v97, %v105
    %v109 = vmul.f32 %v96, %v102
    %v110 = vmul.f32 %v95, %v106
    %v111 = vadd.f32 %v86, %v109
    %v112 = vadd.f32 %v87, %v110
    %113 = vrot.lane.b32.xlu0 %v86, 1
    %v114 = vpop.permute.xlu0 %113
    %115 = vrot.lane.b32.xlu0 %v87, 1
    %v116 = vpop.permute.xlu0 %115
    %vm117 = vcmp.lt.s32.totalorder %v93, 1
    %v118 = vsel %vm117, %v114, %v116
    %v119 = vsel %vm117, %v116, %v114
    %s120 = scalar_lea.vmem %s2, 1
    %v121 = vld [vmem:[%s120] ss:$8 sm:$0x3]
    %v123 = vlaneseq
    %v124 = vshrl.u32 %v123, 7
    %v125 = vsub.s32 0, %v124
    %v126 = vrot.slane %v121, %v125
    %v127 = vlaneseq
    %v128 = vshrl.u32 %v127, 7
    %v129 = vsub.s32 1, %v128
    %v130 = vrot.slane %v121, %v129
    %v133 = vmul.f32 %v119, %v126
    %v134 = vmul.f32 %v118, %v130
    %v135 = vadd.f32 %v111, %v133
    %v136 = vadd.f32 %v112, %v134
    %137 = vrot.lane.b32.xlu0 %v86, 127
    %v138 = vpop.permute.xlu0 %137
    %139 = vrot.lane.b32.xlu0 %v87, 127
    %v140 = vpop.permute.xlu0 %139
    %vm141 = vcmp.lt.s32.totalorder %v93, 127
    %v142 = vsel %vm141, %v138, %v140
    %v143 = vsel %vm141, %v140, %v138
    %s144 = scalar_lea.vmem %s2, 2
    %v145 = vld [vmem:[%s144] ss:$8 sm:$0x3]
    %v147 = vlaneseq
    %v148 = vshrl.u32 %v147, 7
    %v149 = vsub.s32 0, %v148
    %v150 = vrot.slane %v145, %v149
    %v151 = vlaneseq
    %v152 = vshrl.u32 %v151, 7
    %v153 = vsub.s32 1, %v152
    %v154 = vrot.slane %v145, %v153
    %v157 = vmul.f32 %v142, %v150
    %v158 = vmul.f32 %v143, %v154
    %v159 = vadd.f32 %v135, %v157
    %v160 = vadd.f32 %v136, %v158
    %161 = vrot.lane.b32.xlu0 %v86, 126
    %v162 = vpop.permute.xlu0 %161
    %163 = vrot.lane.b32.xlu0 %v87, 126
    %v164 = vpop.permute.xlu0 %163
    %vm165 = vcmp.lt.s32.totalorder %v93, 126
    %v166 = vsel %vm165, %v162, %v164
    %v167 = vsel %vm165, %v164, %v162
    %s168 = scalar_lea.vmem %s2, 3
    %v169 = vld [vmem:[%s168] ss:$8 sm:$0x3]
    %v171 = vlaneseq
    %v172 = vshrl.u32 %v171, 7
    %v173 = vsub.s32 0, %v172
    %v174 = vrot.slane %v169, %v173
    %v175 = vlaneseq
    %v176 = vshrl.u32 %v175, 7
    %v177 = vsub.s32 1, %v176
    %v178 = vrot.slane %v169, %v177
    %v181 = vmul.f32 %v166, %v174
    %v182 = vmul.f32 %v167, %v178
    %v183 = vadd.f32 %v159, %v181
    %v184 = vadd.f32 %v160, %v182
    %185 = vrot.lane.b32.xlu0 %v183, 32
    %v186 = vpop.permute.xlu0 %185
    %187 = vrot.lane.b32.xlu0 %v184, 32
    %v188 = vpop.permute.xlu0 %187
    %vm189 = vcmp.lt.s32.totalorder %v93, 32
    %v190 = vsel %vm189, %v186, %v188
    %v191 = vsel %vm189, %v188, %v186
    %s192 = scalar_lea.vmem %s2, 4
    %v193 = vld [vmem:[%s192] ss:$8 sm:$0x3]
    %v195 = vlaneseq
    %v196 = vshrl.u32 %v195, 7
    %v197 = vsub.s32 0, %v196
    %v198 = vrot.slane %v193, %v197
    %v199 = vlaneseq
    %v200 = vshrl.u32 %v199, 7
    %v201 = vsub.s32 1, %v200
    %v202 = vrot.slane %v193, %v201
    %v205 = vmul.f32 %v191, %v198
    %v206 = vmul.f32 %v190, %v202
    %v207 = vadd.f32 %v183, %v205
    %v208 = vadd.f32 %v184, %v206
    %209 = vrot.lane.b32.xlu0 %v183, 16
    %v210 = vpop.permute.xlu0 %209
    %211 = vrot.lane.b32.xlu0 %v184, 16
    %v212 = vpop.permute.xlu0 %211
    %vm213 = vcmp.lt.s32.totalorder %v93, 16
    %v214 = vsel %vm213, %v210, %v212
    %v215 = vsel %vm213, %v212, %v210
    %s216 = scalar_lea.vmem %s2, 5
    %v217 = vld [vmem:[%s216] ss:$8 sm:$0x3]
    %v219 = vlaneseq
    %v220 = vshrl.u32 %v219, 7
    %v221 = vsub.s32 0, %v220
    %v222 = vrot.slane %v217, %v221
    %v223 = vlaneseq
    %v224 = vshrl.u32 %v223, 7
    %v225 = vsub.s32 1, %v224
    %v226 = vrot.slane %v217, %v225
    %v229 = vmul.f32 %v215, %v222
    %v230 = vmul.f32 %v214, %v226
    %v231 = vadd.f32 %v207, %v229
    %v232 = vadd.f32 %v208, %v230
    %233 = vrot.lane.b32.xlu0 %v183, 112
    %v234 = vpop.permute.xlu0 %233
    %235 = vrot.lane.b32.xlu0 %v184, 112
    %v236 = vpop.permute.xlu0 %235
    %vm237 = vcmp.lt.s32.totalorder %v93, 112
    %v238 = vsel %vm237, %v234, %v236
    %v239 = vsel %vm237, %v236, %v234
    %s240 = scalar_lea.vmem %s2, 6
    %v241 = vld [vmem:[%s240] ss:$8 sm:$0x3]
    %v243 = vlaneseq
    %v244 = vshrl.u32 %v243, 7
    %v245 = vsub.s32 0, %v244
    %v246 = vrot.slane %v241, %v245
    %v247 = vlaneseq
    %v248 = vshrl.u32 %v247, 7
    %v249 = vsub.s32 1, %v248
    %v250 = vrot.slane %v241, %v249
    %v253 = vmul.f32 %v238, %v246
    %v254 = vmul.f32 %v239, %v250
    %v255 = vadd.f32 %v231, %v253
    %v256 = vadd.f32 %v232, %v254
    %257 = vrot.lane.b32.xlu0 %v183, 96
    %v258 = vpop.permute.xlu0 %257
    %259 = vrot.lane.b32.xlu0 %v184, 96
    %v260 = vpop.permute.xlu0 %259
    %vm261 = vcmp.lt.s32.totalorder %v93, 96
    %v262 = vsel %vm261, %v258, %v260
    %v263 = vsel %vm261, %v260, %v258
    %s264 = scalar_lea.vmem %s2, 7
    %v265 = vld [vmem:[%s264] ss:$8 sm:$0x3]
    %v267 = vlaneseq
    %v268 = vshrl.u32 %v267, 7
    %v269 = vsub.s32 0, %v268
    %v270 = vrot.slane %v265, %v269
    %v271 = vlaneseq
    %v272 = vshrl.u32 %v271, 7
    %v273 = vsub.s32 1, %v272
    %v274 = vrot.slane %v265, %v273
    %v277 = vmul.f32 %v262, %v270
    %v278 = vmul.f32 %v263, %v274
    %v279 = vadd.f32 %v255, %v277
    %v280 = vadd.f32 %v256, %v278
    %v281 = vmul.f32 %v86, 25.0
    %v282 = vmul.f32 %v87, 25.0
    %vm283 = vcmp.ne.f32.partialorder %v279, %v281
    %vm284 = vcmp.ne.f32.partialorder %v280, %v282
    %v285 = vsel %vm283, 1, 0
    %v286 = vsel %vm284, 1, 0
    %v287 = vcvt.s32.f32 %v285
    %v288 = vcvt.s32.f32 %v286
    %v289 = vadd.f32 %v86, %v87
    %290 = vadd.xlane.f32.xlu0 %v289
    %v291 = vpop.xlane.xlu0 %290
    %v292 = vadd.f32 %v84, %v85
    %293 = vadd.xlane.f32.xlu0 %v292
    %v294 = vpop.xlane.xlu0 %293
    %v295 = vmul.f32 %v86, %v84
    %v296 = vmul.f32 %v87, %v85
    %v297 = vadd.f32 %v295, %v296
    %298 = vadd.xlane.f32.xlu0 %v297
    %v299 = vpop.xlane.xlu0 %298
    %v300 = vadd.f32 %v287, %v288
    %301 = vadd.xlane.f32.xlu0 %v300
    %v302 = vpop.xlane.xlu0 %301
    %v303 = vsub.f32 %v84, %v86
    %v304 = vsub.f32 %v85, %v87
    %v305 = vand.u32 2147483647, %v303
    %v306 = vand.u32 2147483647, %v304
    %v307 = vmul.f32 %v287, %v305
    %v308 = vmul.f32 %v288, %v306
    %v309 = vadd.f32 %v307, %v308
    %310 = vadd.xlane.f32.xlu0 %v309
    %v311 = vpop.xlane.xlu0 %310
    %v312 = vadd.f32 %v302, 1e-06
    %v313 = vrcp.pop %v312
    %v314 = vmul.f32 %v311, %v313
    %v315 = vsub.f32 %v291, %v299
    %v316 = vadd.f32 %v291, 1e-06
    %v317 = vrcp.pop %v316
    %v318 = vmul.f32 %v315, %v317
    %v319 = vadd.f32 %v314, %v318
    %v320 = vsub.f32 %v294, %v299
    %v321 = vsub.f32 256.0, %v291
    %v322 = vadd.f32 %v321, 1e-06
    %v323 = vrcp.pop %v322
    %v324 = vmul.f32 %v320, %v323
    %v325 = vadd.f32 %v319, %v324
    %s326 = sadd.s32 0, 0
    %s327 = smul.u32 %s326, 8
    %v328 = vlaneseq
    %v329 = vshrl.u32 %v328, 7
    %v330 = vstv %s327
    %v331 = vadd.s32 %v330, %v329
    %v332 = vld [vmem:[#allocation2] sm:$0xff]
    %vm333 = vcmp.lt.s32.totalorder %v331, 8
    %v334 = vsel %vm333, %v325, 0.0
    %v335 = vadd.f32 %v332, %v334
    %vm336 = vcmask 7168
    %337 = vst.msk [vmem:[#allocation2] sm:$0xff] %vm336, %v335
    // Predicated region
    $region22: #{_hel_impl.1} parent=1 // pred_check
      %p338 = pneg %p78
    $region23: #{_hel_impl.1} parent=1 // pred_check_branch
      %340 = sbr.rel (%p338) target = $region25
    $region24: #{_hel_impl.1} parent=1 // pred_region
      %v341 = vld [vmem:[#allocation2] sm:$0xff]
      %v342 = vsel %vm336, %v341, 0.0
      %v343 = vrot.slane %v342, 4
      %v344 = vadd.f32 %v342, %v343
      %v345 = vrot.slane %v344, 2
      %v346 = vadd.f32 %v344, %v345
      %v347 = vrot.slane %v346, 1
      %v348 = vadd.f32 %v346, %v347
      %vm349 = vcmask 0
      %350 = vst.msk [vmem:[#allocation3] sm:$0x1] %vm349, %v348
    $region25: #{_hel_impl.1} parent=1 // pred_fallthru
      _
    // Predicated region
    $region26: #{_hel_impl.1} parent=1 // pred_check
      _
    $region27: #{_hel_impl.1} parent=1 // pred_check_branch
      %352 = sbr.rel (0) target = $region29
    $region28: #{_hel_impl.1} parent=1 // pred_region
      %s354 = ssub.s32 16, 16
      %355 = vsyncadd [#allocation4], %s354
      %s357 = sshll.u32 [#allocation3], 4
      %s358 = int_to_ptr.vmem [resolvable:$true] %s357
      %360 = dma.vmem_to_hbm [thread:$0]  %s358, 16, %s4, [#allocation4]
    $region29: #{_hel_impl.1} parent=1 // pred_fallthru
      _
    // Predicated region
    $region30: #{_hel_impl.1} parent=1 // pred_check
      _
    $region31: #{_hel_impl.1} parent=1 // pred_check_branch
      %362 = sbr.rel (0) target = $region33
    $region32: #{_hel_impl.1} parent=1 // pred_region
      %363 = dma.done [#allocation4], 16
    $region33: #{_hel_impl.1} parent=1 // pred_fallthru
      _
    %364 = vsyncpa [#allocation4], 1

</llo_original>
